<compile_context>
chip_gen: v6e
topology: v6e:2x2x1
jax: 0.10.0
libtpu: 0.0.40
codegen_flags: <defaults>
</compile_context>

<pallas_src>
import functools

import jax
import jax.numpy as jnp
from jax.experimental import pallas as pl
from jax.experimental.pallas import tpu as pltpu


# ---------------------------------------------------------------------------
# Pallas kernel: one tile of TM pixels (lanes), all channels resident (sublanes).
# ---------------------------------------------------------------------------
def _attn_block_kernel(F_l, xg_ref, w_ref, b_ref, wpsi_ref, bpsi_ref, o_ref):
    xg = xg_ref[...]                                   # (F_l + F_g, TM), storage dtype

    # Fused W_x / W_g 1x1 conv (+ folded BN): one MXU matmul, K = F_l + F_g,
    # f32 accumulation regardless of storage dtype.
    h = jnp.dot(w_ref[...], xg, preferred_element_type=jnp.float32) + b_ref[...]
    h = jnp.maximum(h, 0.0)                            # ReLU, (F_int, TM) f32

    # psi: 1x1 conv down to a single channel.  An (F_int -> 1) projection is a
    # terrible MXU shape, so use VPU multiply + cross-sublane reduce instead.
    psi = jnp.sum(h * wpsi_ref[...], axis=0, keepdims=True) + bpsi_ref[...]
    psi = jax.nn.sigmoid(psi)                          # (1, TM) f32

    x = xg[:F_l, :].astype(jnp.float32)                # gating input slice (F_l, TM)
    o_ref[...] = (x * psi).astype(o_ref.dtype)         # lane-dense store


def _pick_tile(hw, c_in, c_out, itemsize, desired=1024,
               vmem_budget_bytes=24 * 1024 * 1024):
    """Largest pixel tile (multiple of 128, divides hw) within a VMEM budget.

    Budget counts double-buffered input + output tiles; sized conservatively so
    it also fits v7x (64 MiB VMEM per core / lower scoped default)."""
    per_row = 2 * (c_in + c_out) * itemsize            # double-buffered bytes per pixel
    tm = min(desired, hw, max(vmem_budget_bytes // per_row, 128))
    tm = max(128, (tm // 128) * 128)
    while hw % tm:
        tm -= 128
    return tm


def attention_block_pallas(xg, w_fused, b_fused, wpsi, bpsi, *, F_l, tm=None):
    """xg: (B, F_l + F_g, H*W) stacked channels-first pixel tensor."""
    B, Cxg, HW = xg.shape
    F_int = w_fused.shape[0]
    if HW % 128 != 0:
        raise ValueError("pad spatial dims so H*W is a multiple of 128")
    if tm is None:
        tm = _pick_tile(HW, Cxg, F_l, xg.dtype.itemsize)
    assert HW % tm == 0

    kernel = functools.partial(_attn_block_kernel, F_l)
    tile = lambda b, i: (b, 0, i)
    full = lambda b, i: (0, 0)

    return pl.pallas_call(
        kernel,
        out_shape=jax.ShapeDtypeStruct((B, F_l, HW), xg.dtype),
        grid_spec=pltpu.PrefetchScalarGridSpec(
            num_scalar_prefetch=0,
            grid=(B, HW // tm),
            in_specs=[
                pl.BlockSpec((None, Cxg, tm), tile),   # stacked [x; g] pixels
                pl.BlockSpec((F_int, Cxg), full),      # fused folded conv weight
                pl.BlockSpec((F_int, 1), full),        # fused folded conv bias
                pl.BlockSpec((F_int, 1), full),        # psi weight (folded)
                pl.BlockSpec((1, 1), full),            # psi bias (folded)
            ],
            out_specs=pl.BlockSpec((None, F_l, tm), tile),
        ),
        compiler_params=pltpu.CompilerParams(
            dimension_semantics=("parallel", "parallel"),
            vmem_limit_bytes=48 * 1024 * 1024,
        ),
    )(xg, w_fused, b_fused, wpsi, bpsi)


# ---------------------------------------------------------------------------
# Parameter setup (deterministic), BN folding, fusion, NCHW glue.
# ---------------------------------------------------------------------------
def _fold_bn(conv_w, conv_b, gamma, beta, mean, var, eps=1e-5):
    """conv_w: (C_out, C_in) 1x1 conv weight. Returns (C_in, C_out) eff weight and
    (1, C_out) eff bias with eval-mode BN folded in."""
    s = gamma / jnp.sqrt(var + eps)                    # (C_out,)
    w_eff = (conv_w * s[:, None]).T                    # (C_in, C_out)
    b_eff = (s * (conv_b - mean) + beta)[None, :]      # (1, C_out)
    return w_eff.astype(jnp.float32), b_eff.astype(jnp.float32)


def make_params(F_g, F_l, F_int, key):
    ks = jax.random.split(key, 12)
    u = lambda k, shape, b: jax.random.uniform(k, shape, jnp.float32, -b, b)

    wg = u(ks[0], (F_int, F_g), 1.0 / (F_g ** 0.5))    # Conv2d(F_g -> F_int, 1x1)
    bg = u(ks[1], (F_int,), 1.0 / (F_g ** 0.5))
    wx = u(ks[2], (F_int, F_l), 1.0 / (F_l ** 0.5))    # Conv2d(F_l -> F_int, 1x1)
    bx = u(ks[3], (F_int,), 1.0 / (F_l ** 0.5))
    wp = u(ks[4], (1, F_int), 1.0 / (F_int ** 0.5))    # Conv2d(F_int -> 1, 1x1)
    bp = u(ks[5], (1,), 1.0 / (F_int ** 0.5))

    # BatchNorm params / running stats (eval mode), made non-trivial.
    bn = lambda k, n: (1.0 + 0.1 * jax.random.normal(k, (n,)),
                       0.1 * jax.random.normal(jax.random.fold_in(k, 1), (n,)),
                       0.05 * jax.random.normal(jax.random.fold_in(k, 2), (n,)),
                       jnp.abs(1.0 + 0.1 * jax.random.normal(jax.random.fold_in(k, 3), (n,))))
    g_bn = bn(ks[6], F_int)
    x_bn = bn(ks[7], F_int)
    p_bn = bn(ks[8], 1)

    wg_e, bg_e = _fold_bn(wg, bg, *g_bn)
    wx_e, bx_e = _fold_bn(wx, bx, *x_bn)
    wp_e, bp_e = _fold_bn(wp, bp, *p_bn)
    return wg_e, bg_e, wx_e, bx_e, wp_e, bp_e


def _fuse_params(params, dtype):
    """Fuse folded W_x / W_g into one (F_int, F_l+F_g) weight matching [x; g]."""
    wg_e, bg_e, wx_e, bx_e, wp_e, bp_e = params
    w_fused = jnp.concatenate([wx_e, wg_e], axis=0).T.astype(dtype)  # (F_int, F_l+F_g)
    b_fused = (bg_e + bx_e).T.astype(jnp.float32)                    # (F_int, 1)
    wpsi = wp_e.astype(jnp.float32)                                  # (F_int, 1)
    bpsi = bp_e.astype(jnp.float32)                                  # (1, 1)
    return w_fused, b_fused, wpsi, bpsi


def attention_block(g_nchw, x_nchw, params, *, dtype=jnp.float32, tm=None):
    """NCHW wrapper matching the PyTorch forward (eval-mode BN)."""
    B, F_g, H, W = g_nchw.shape
    F_l = x_nchw.shape[1]
    HW = H * W
    # NCHW is already channels-first -> only free reshapes, no transposes.
    # Stack [x; g] along channels so both 1x1 convs collapse into one matmul.
    # TODO(synk): in a full model the producer should emit this stacked tensor
    # directly (or the concat should fuse upstream) to avoid one extra HBM pass.
    xg = jnp.concatenate(
        [x_nchw.reshape(B, F_l, HW), g_nchw.reshape(B, F_g, HW)], axis=1
    ).astype(dtype)
    w_fused, b_fused, wpsi, bpsi = _fuse_params(params, dtype)
    out = attention_block_pallas(xg, w_fused, b_fused, wpsi, bpsi, F_l=F_l, tm=tm)
    return out.reshape(B, F_l, H, W)                   # free reshape back to NCHW


# ---------------------------------------------------------------------------
# Pure-JAX references.
# ---------------------------------------------------------------------------
def _reference_nchw(g_nchw, x_nchw, params):
    """f32 reference following the PyTorch module (BN folded, per-branch convs)."""
    wg_e, bg_e, wx_e, bx_e, wp_e, bp_e = params
    B, F_g, H, W = g_nchw.shape
    F_l = x_nchw.shape[1]
    g_mat = jnp.transpose(g_nchw, (0, 2, 3, 1)).reshape(-1, F_g)
    x_mat = jnp.transpose(x_nchw, (0, 2, 3, 1)).reshape(-1, F_l)
    h = jnp.maximum(g_mat @ wg_e + bg_e + x_mat @ wx_e + bx_e, 0.0)
    psi = jax.nn.sigmoid(h @ wp_e + bp_e)
    out = x_mat * psi
    return jnp.transpose(out.reshape(B, H, W, F_l), (0, 3, 1, 2))


def _reference_from_kernel_inputs(xg, w_fused, b_fused, wpsi, bpsi, F_l):
    """f32 reference computed from the (possibly low-precision) kernel inputs."""
    xg32 = xg.astype(jnp.float32)                      # (B, C, HW)
    w32 = w_fused.astype(jnp.float32)                  # (F_int, C)
    h = jnp.maximum(jnp.einsum("ic,bcp->bip", w32, xg32) + b_fused[None], 0.0)
    psi = jax.nn.sigmoid(jnp.sum(h * wpsi[None], axis=1, keepdims=True) + bpsi[None])
    return xg32[:, :F_l, :] * psi


if __name__ == "__main__":
    B, F_g, F_l, F_int, H, W = 2, 4, 4, 8, 16, 16      # per-batch H*W = 256 pixels
    key = jax.random.PRNGKey(0)
    k_g, k_x, k_p = jax.random.split(key, 3)

    g = jax.random.normal(k_g, (B, F_g, H, W), jnp.float32)
    x = jax.random.normal(k_x, (B, F_l, H, W), jnp.float32)
    params = make_params(F_g, F_l, F_int, k_p)

    # --- f32 storage path: tight check against the NCHW reference -----------
    out_f32 = jax.block_until_ready(attention_block(g, x, params, dtype=jnp.float32))
    ref_f32 = _reference_nchw(g, x, params)
    assert out_f32.shape == (B, F_l, H, W)
    assert jnp.allclose(out_f32, ref_f32, atol=1e-4, rtol=1e-4), "f32 mismatch"

    # --- bf16 storage path (halves HBM traffic; f32 accumulation in-kernel) --
    out_bf16 = jax.block_until_ready(attention_block(g, x, params, dtype=jnp.bfloat16))
    xg_bf16 = jnp.concatenate(
        [x.reshape(B, F_l, H * W), g.reshape(B, F_g, H * W)], axis=1
    ).astype(jnp.bfloat16)
    w_f, b_f, wp_f, bp_f = _fuse_params(params, jnp.bfloat16)
    ref_bf16 = _reference_from_kernel_inputs(xg_bf16, w_f, b_f, wp_f, bp_f, F_l)
    ref_bf16 = ref_bf16.reshape(B, F_l, H, W)
    assert out_bf16.shape == (B, F_l, H, W)
    assert jnp.allclose(out_bf16.astype(jnp.float32), ref_bf16,
                        atol=1e-2, rtol=1e-2), "bf16 mismatch"

    print("KERNEL_OK")
</pallas_src>

<mosaic_0001>
module attributes {stable_mosaic.version = 11 : i64} {
  func.func @_attn_block_kernel(%arg0: i32, %arg1: i32, %arg2: memref<1x8x256xf32, #tpu.memory_space<vmem>>, %arg3: memref<8x8xf32, #tpu.memory_space<vmem>>, %arg4: memref<8x1xf32, #tpu.memory_space<vmem>>, %arg5: memref<8x1xf32, #tpu.memory_space<vmem>>, %arg6: memref<1x1xf32, #tpu.memory_space<vmem>>, %arg7: memref<1x4x256xf32, #tpu.memory_space<vmem>>) attributes {dimension_semantics = [#tpu.dimension_semantics<parallel>, #tpu.dimension_semantics<parallel>], iteration_bounds = array<i64: 2, 1>, scalar_prefetch = 0 : i64, scratch_operands = 0 : i64, tpu.core_type = #tpu.core_type<tc>, window_params = [{transform_indices = @transform_0, window_bounds = array<i64: 1, 8, 256>}, {pipeline_mode = #tpu.pipeline_mode<synchronous>, transform_indices = @transform_1, window_bounds = array<i64: 8, 8>}, {pipeline_mode = #tpu.pipeline_mode<synchronous>, transform_indices = @transform_2, window_bounds = array<i64: 8, 1>}, {pipeline_mode = #tpu.pipeline_mode<synchronous>, transform_indices = @transform_3, window_bounds = array<i64: 8, 1>}, {pipeline_mode = #tpu.pipeline_mode<synchronous>, transform_indices = @transform_4, window_bounds = array<i64: 1, 1>}, {transform_indices = @transform_5, window_bounds = array<i64: 1, 4, 256>}]} {
    %c0 = arith.constant 0 : index
    %c0_0 = arith.constant 0 : index
    %c0_1 = arith.constant 0 : index
    %0 = vector.load %arg2[%c0, %c0_0, %c0_1] : memref<1x8x256xf32, #tpu.memory_space<vmem>>, vector<1x8x256xf32>
    %1 = vector.shape_cast %0 : vector<1x8x256xf32> to vector<8x256xf32>
    %c0_2 = arith.constant 0 : index
    %c0_3 = arith.constant 0 : index
    %2 = vector.load %arg3[%c0_2, %c0_3] : memref<8x8xf32, #tpu.memory_space<vmem>>, vector<8x8xf32>
    %cst = arith.constant dense<0.000000e+00> : vector<8x256xf32>
    %3 = tpu.matmul %2, %1, %cst {dimension_numbers = #tpu.dot_dimension_numbers<[1], [0], [0], [1], [0, 0, 1, 1], [], []>} : vector<8x8xf32>, vector<8x256xf32>, vector<8x256xf32> -> vector<8x256xf32>
    %c0_4 = arith.constant 0 : index
    %c0_5 = arith.constant 0 : index
    %4 = vector.load %arg4[%c0_4, %c0_5] : memref<8x1xf32, #tpu.memory_space<vmem>>, vector<8x1xf32>
    %5 = vector.broadcast %4 : vector<8x1xf32> to vector<8x256xf32>
    %6 = arith.addf %3, %5 : vector<8x256xf32>
    %cst_6 = arith.constant 0.000000e+00 : f32
    %7 = vector.broadcast %cst_6 : f32 to vector<8x256xf32>
    %8 = arith.maximumf %6, %7 : vector<8x256xf32>
    %c0_7 = arith.constant 0 : index
    %c0_8 = arith.constant 0 : index
    %9 = vector.load %arg5[%c0_7, %c0_8] : memref<8x1xf32, #tpu.memory_space<vmem>>, vector<8x1xf32>
    %10 = vector.broadcast %9 : vector<8x1xf32> to vector<8x256xf32>
    %11 = arith.mulf %8, %10 : vector<8x256xf32>
    %cst_9 = arith.constant dense<0.000000e+00> : vector<256xf32>
    %12 = vector.multi_reduction <add>, %11, %cst_9 [0] : vector<8x256xf32> to vector<256xf32>
    %13 = vector.shape_cast %12 : vector<256xf32> to vector<1x256xf32>
    %c0_10 = arith.constant 0 : index
    %c0_11 = arith.constant 0 : index
    %14 = vector.load %arg6[%c0_10, %c0_11] : memref<1x1xf32, #tpu.memory_space<vmem>>, vector<1x1xf32>
    %15 = vector.broadcast %14 : vector<1x1xf32> to vector<1x256xf32>
    %16 = arith.addf %13, %15 : vector<1x256xf32>
    %17 = arith.negf %16 : vector<1x256xf32>
    %18 = math.exp %17 : vector<1x256xf32>
    %cst_12 = arith.constant 1.000000e+00 : f32
    %19 = vector.broadcast %cst_12 : f32 to vector<1x256xf32>
    %20 = arith.addf %19, %18 : vector<1x256xf32>
    %21 = arith.divf %19, %20 : vector<1x256xf32>
    %22 = vector.extract_strided_slice %1 {offsets = [0, 0], sizes = [4, 256], strides = [1, 1]} : vector<8x256xf32> to vector<4x256xf32>
    %23 = vector.broadcast %21 : vector<1x256xf32> to vector<4x256xf32>
    %24 = arith.mulf %22, %23 : vector<4x256xf32>
    %c0_13 = arith.constant 0 : index
    %c0_14 = arith.constant 0 : index
    %c0_15 = arith.constant 0 : index
    %25 = vector.load %arg7[%c0_13, %c0_14, %c0_15] : memref<1x4x256xf32, #tpu.memory_space<vmem>>, vector<1x4x256xf32>
    %26 = vector.shape_cast %25 : vector<1x4x256xf32> to vector<4x256xf32>
    %27 = vector.shape_cast %24 : vector<4x256xf32> to vector<1x4x256xf32>
    tpu.vector_store %arg7[%c0_13, %c0_14, %c0_15], %27 {strides = array<i32>} : memref<1x4x256xf32, #tpu.memory_space<vmem>>, vector<1x4x256xf32>,
    return
  }
  func.func @transform_0(%arg0: i32, %arg1: i32) -> (i32, i32, i32) {
    %c0_i32 = arith.constant 0 : i32
    %c0_i32_0 = arith.constant 0 : i32
    return %arg0, %c0_i32, %arg1 : i32, i32, i32
  }
  func.func @transform_1(%arg0: i32, %arg1: i32) -> (i32, i32) {
    %c0_i32 = arith.constant 0 : i32
    %c0_i32_0 = arith.constant 0 : i32
    %c0_i32_1 = arith.constant 0 : i32
    return %c0_i32, %c0_i32_0 : i32, i32
  }
  func.func @transform_2(%arg0: i32, %arg1: i32) -> (i32, i32) {
    %c0_i32 = arith.constant 0 : i32
    %c0_i32_0 = arith.constant 0 : i32
    %c0_i32_1 = arith.constant 0 : i32
    return %c0_i32, %c0_i32_0 : i32, i32
  }
  func.func @transform_3(%arg0: i32, %arg1: i32) -> (i32, i32) {
    %c0_i32 = arith.constant 0 : i32
    %c0_i32_0 = arith.constant 0 : i32
    %c0_i32_1 = arith.constant 0 : i32
    return %c0_i32, %c0_i32_0 : i32, i32
  }
  func.func @transform_4(%arg0: i32, %arg1: i32) -> (i32, i32) {
    %c0_i32 = arith.constant 0 : i32
    %c0_i32_0 = arith.constant 0 : i32
    %c0_i32_1 = arith.constant 0 : i32
    return %c0_i32, %c0_i32_0 : i32, i32
  }
  func.func @transform_5(%arg0: i32, %arg1: i32) -> (i32, i32, i32) {
    %c0_i32 = arith.constant 0 : i32
    %c0_i32_0 = arith.constant 0 : i32
    return %arg0, %c0_i32, %arg1 : i32, i32, i32
  }
}

</mosaic_0001>

<llo_original>
// kernel: tpu_custom_call.1
$region0: #{tpu_custom_call.1}
  #allocation0 [shape = 'u32[]', space=smem, size = 0x4, offset = 0x4, fixed_abs, tag = 'smem constant byte address 0x4 - core index']
  #allocation1 [shape = 'u32[144,128]{1,0:T(1,128)}', space=vmem, size = 0x12000, scoped, tag = 'internal scratch']
  #allocation2 [shape = 'f32[1,1]{1,0:T(1,128)S(1)}', space=vmem, size = 0x200, scoped, tag = 'scoped memory for tpu_custom_call.1']
  %s0 = inlined_call_operand.hbm [shape: f32[2,8,256], index: 0, kind: input, shape index: {}]
  %s1 = inlined_call_operand.vmem [shape: f32[8,8], index: 1, kind: input, shape index: {}]
  %s2 = inlined_call_operand.vmem [shape: f32[8,1], index: 2, kind: input, shape index: {}]
  %s3 = inlined_call_operand.vmem [shape: f32[8,1], index: 3, kind: input, shape index: {}]
  %s4 = inlined_call_operand.<no memory space> [shape: f32[1,1], index: 4, kind: input, shape index: {}]
  %s5 = inlined_call_operand.hbm [shape: f32[2,4,256], index: 5, kind: output, shape index: {}]
  %s6 = sld [smem:[#allocation0]]
  $region57: #{tpu_custom_call.1} parent=0
    _
  %s8 = ssub.s32 1, %s6
  %s9 = scalar_select 0, %s8, %s6
  %v10 = vstv %s4
  %11 = vst [vmem:[#allocation2] sm:$0x1] %v10
  $region1: #{tpu_custom_call.1} parent=0
    #allocation3 [shape = 'u8[16384]{0}', space=vmem, size = 0x4000, scoped, tag = 'input window, operand 0']
    #allocation4 [shape = 's32[2]{0}', space=sflag, size = 0x8, scoped, tag = 'scoped memory for tpu_custom_call.1']
    #allocation5 [shape = 's32[2]{0}', space=sflag, size = 0x8, scoped, tag = 'scoped memory for tpu_custom_call.1']
    #allocation6 [shape = 'u8[8192]{0}', space=vmem, size = 0x2000, scoped, tag = 'output window, operand 0']
    %12 = vsyncpa [#allocation4], 0
    %s13 = scalar_lea.sflag [#allocation4], 1
    %14 = vsyncpa %s13, 0
    %15 = vsyncpa [#allocation5], 0
    %s16 = scalar_lea.sflag [#allocation5], 1
    %17 = vsyncpa %s16, 0
    loop: start=0, step=1, limit=4
    $region2: #{tpu_custom_call.1} parent=1 // loop_pre_header
      _
    $region3: #{tpu_custom_call.1} parent=1 // loop_header
      %s19 = sphi 0, %s23
      %p20 = scmp.ge.s32.totalorder %s19, 4
      %s26 = sphi 0, %s38
      %s27 = sphi 0, %s34
      %s28 = sphi 0, %s26
      %s29 = sphi 0, %s27
      %s30 = sphi 0, %s28
      %s31 = sphi 0, %s29
      %s43 = sphi 0, %s45
      %s46 = sphi 0, %s43
      %s47 = sphi 0, %s46
      %s63 = sphi 0, %s47
      %s67 = sphi 0, %s67
      %s69 = sphi 0, %s67
      %s70 = sphi 0, %s69
      %s84 = sphi 0, %s70
      %s88 = sphi 0, %s88
      %s90 = sphi 0, %s88
      %s91 = sphi 0, %s90
      %s105 = sphi 0, %s91
      %s109 = sphi 0, %s109
      %s111 = sphi 0, %s109
      %s112 = sphi 0, %s111
      %s126 = sphi 0, %s112
      %s130 = sphi 0, %s130
      %s132 = sphi 0, %s130
      %s133 = sphi 0, %s132
      %s147 = sphi 0, %s133
      %s155 = sphi 0, %s157
      %s158 = sphi 0, %s155
      %s159 = sphi 0, %s158
      %s175 = sphi 0, %s159
    $region4: #{tpu_custom_call.1} parent=1 // loop_header_branch
      %22 = sbr.rel (%p20) target = $region8
    $region5: #{tpu_custom_call.1} parent=1 // loop_body
      %s24 = ssub.s32 %s19, 1
      %s25 = ssub.s32 %s19, 2
      %s32 = sadd.s32 1, %s27
      %p33 = scmp.ge.s32.totalorder %s32, 1
      %s34 = scalar_select %p33, 0, %s32
      %s35 = sadd.s32 1, %s26
      %s36 = scalar_select %p33, %s35, %s26
      %p37 = scmp.ge.s32.totalorder %s36, 2
      %s38 = scalar_select %p37, 0, %s36
      %s39 = ssub.s32 %s26, %s38
      %s40 = ssub.s32 %s27, %s34
      %s41 = sor.u32 %s39, %s40
      %p42 = scmp.eq.s32.totalorder %s41, 0
      %s44 = sadd.s32 %s43, 1
      %s45 = scalar_select %p42, %s43, %s44
      %p48 = pneg %p42
      %p49 = scmp.eq.s32.totalorder %s19, 1
      %p50 = por %p48, %p49
      %p51 = scmp.ne.s32.totalorder %s43, %s46
      %p52 = scmp.eq.s32.totalorder %s19, 0
      %p53 = por %p51, %p52
      %p54 = scmp.ne.s32.totalorder %s43, %s46
      %p55 = scmp.eq.s32.totalorder %s24, 1
      %p56 = por %p54, %p55
      %p57 = scmp.ne.s32.totalorder %s46, %s47
      %p58 = scmp.eq.s32.totalorder %s24, 0
      %p59 = por %p57, %p58
      %p60 = scmp.ne.s32.totalorder %s46, %s47
      %p61 = scmp.eq.s32.totalorder %s25, 1
      %p62 = por %p60, %p61
      %p64 = scmp.ne.s32.totalorder %s47, %s63
      %p65 = scmp.eq.s32.totalorder %s25, 0
      %p66 = por %p64, %p65
      %s68 = sadd.s32 %s67, 1
      %p71 = scmp.eq.s32.totalorder %s19, 1
      %p72 = scmp.ne.s32.totalorder %s67, %s69
      %p73 = scmp.eq.s32.totalorder %s19, 0
      %p74 = por %p72, %p73
      %p75 = scmp.ne.s32.totalorder %s67, %s69
      %p76 = scmp.eq.s32.totalorder %s24, 1
      %p77 = por %p75, %p76
      %p78 = scmp.ne.s32.totalorder %s69, %s70
      %p79 = scmp.eq.s32.totalorder %s24, 0
      %p80 = por %p78, %p79
      %p81 = scmp.ne.s32.totalorder %s69, %s70
      %p82 = scmp.eq.s32.totalorder %s25, 1
      %p83 = por %p81, %p82
      %p85 = scmp.ne.s32.totalorder %s70, %s84
      %p86 = scmp.eq.s32.totalorder %s25, 0
      %p87 = por %p85, %p86
      %s89 = sadd.s32 %s88, 1
      %p92 = scmp.eq.s32.totalorder %s19, 1
      %p93 = scmp.ne.s32.totalorder %s88, %s90
      %p94 = scmp.eq.s32.totalorder %s19, 0
      %p95 = por %p93, %p94
      %p96 = scmp.ne.s32.totalorder %s88, %s90
      %p97 = scmp.eq.s32.totalorder %s24, 1
      %p98 = por %p96, %p97
      %p99 = scmp.ne.s32.totalorder %s90, %s91
      %p100 = scmp.eq.s32.totalorder %s24, 0
      %p101 = por %p99, %p100
      %p102 = scmp.ne.s32.totalorder %s90, %s91
      %p103 = scmp.eq.s32.totalorder %s25, 1
      %p104 = por %p102, %p103
      %p106 = scmp.ne.s32.totalorder %s91, %s105
      %p107 = scmp.eq.s32.totalorder %s25, 0
      %p108 = por %p106, %p107
      %s110 = sadd.s32 %s109, 1
      %p113 = scmp.eq.s32.totalorder %s19, 1
      %p114 = scmp.ne.s32.totalorder %s109, %s111
      %p115 = scmp.eq.s32.totalorder %s19, 0
      %p116 = por %p114, %p115
      %p117 = scmp.ne.s32.totalorder %s109, %s111
      %p118 = scmp.eq.s32.totalorder %s24, 1
      %p119 = por %p117, %p118
      %p120 = scmp.ne.s32.totalorder %s111, %s112
      %p121 = scmp.eq.s32.totalorder %s24, 0
      %p122 = por %p120, %p121
      %p123 = scmp.ne.s32.totalorder %s111, %s112
      %p124 = scmp.eq.s32.totalorder %s25, 1
      %p125 = por %p123, %p124
      %p127 = scmp.ne.s32.totalorder %s112, %s126
      %p128 = scmp.eq.s32.totalorder %s25, 0
      %p129 = por %p127, %p128
      %s131 = sadd.s32 %s130, 1
      %p134 = scmp.eq.s32.totalorder %s19, 1
      %p135 = scmp.ne.s32.totalorder %s130, %s132
      %p136 = scmp.eq.s32.totalorder %s19, 0
      %p137 = por %p135, %p136
      %p138 = scmp.ne.s32.totalorder %s130, %s132
      %p139 = scmp.eq.s32.totalorder %s24, 1
      %p140 = por %p138, %p139
      %p141 = scmp.ne.s32.totalorder %s132, %s133
      %p142 = scmp.eq.s32.totalorder %s24, 0
      %p143 = por %p141, %p142
      %p144 = scmp.ne.s32.totalorder %s132, %s133
      %p145 = scmp.eq.s32.totalorder %s25, 1
      %p146 = por %p144, %p145
      %p148 = scmp.ne.s32.totalorder %s133, %s147
      %p149 = scmp.eq.s32.totalorder %s25, 0
      %p150 = por %p148, %p149
      %s151 = ssub.s32 %s26, %s38
      %s152 = ssub.s32 %s27, %s34
      %s153 = sor.u32 %s151, %s152
      %p154 = scmp.eq.s32.totalorder %s153, 0
      %s156 = sadd.s32 %s155, 1
      %s157 = scalar_select %p154, %s155, %s156
      %p160 = pneg %p154
      %p161 = scmp.eq.s32.totalorder %s19, 1
      %p162 = por %p160, %p161
      %p163 = scmp.ne.s32.totalorder %s155, %s158
      %p164 = scmp.eq.s32.totalorder %s19, 0
      %p165 = por %p163, %p164
      %p166 = scmp.ne.s32.totalorder %s155, %s158
      %p167 = scmp.eq.s32.totalorder %s24, 1
      %p168 = por %p166, %p167
      %p169 = scmp.ne.s32.totalorder %s158, %s159
      %p170 = scmp.eq.s32.totalorder %s24, 0
      %p171 = por %p169, %p170
      %p172 = scmp.ne.s32.totalorder %s158, %s159
      %p173 = scmp.eq.s32.totalorder %s25, 1
      %p174 = por %p172, %p173
      %p176 = scmp.ne.s32.totalorder %s159, %s175
      %p177 = scmp.eq.s32.totalorder %s25, 0
      %p178 = por %p176, %p177
      %p179 = scmp.le.s32.totalorder 1, %s19
      %p180 = scmp.lt.s32.totalorder %s19, 3
      %p181 = pnand %p179, %p180
      %p182 = pneg %p181
      // Predicated region
      $region9: #{tpu_custom_call.1} parent=5 // pred_check
        _
      $region10: #{tpu_custom_call.1} parent=5 // pred_check_branch
        %184 = sbr.rel (%p181) target = $region12
      $region11: #{tpu_custom_call.1} parent=5 // pred_region
        %s185 = ssub.s32 %s19, 1
        // Predicated region
        $region13: #{tpu_custom_call.1} parent=11 // pred_check
          %p186 = pneg %p80
        $region14: #{tpu_custom_call.1} parent=11 // pred_check_branch
          %188 = sbr.rel (%p186) target = $region16
        $region15: #{tpu_custom_call.1} parent=11 // pred_region
          _
        $region16: #{tpu_custom_call.1} parent=11 // pred_fallthru
          _
        // Predicated region
        $region17: #{tpu_custom_call.1} parent=11 // pred_check
          %p189 = pneg %p101
        $region18: #{tpu_custom_call.1} parent=11 // pred_check_branch
          %191 = sbr.rel (%p189) target = $region20
        $region19: #{tpu_custom_call.1} parent=11 // pred_region
          _
        $region20: #{tpu_custom_call.1} parent=11 // pred_fallthru
          _
        // Predicated region
        $region21: #{tpu_custom_call.1} parent=11 // pred_check
          %p192 = pneg %p122
        $region22: #{tpu_custom_call.1} parent=11 // pred_check_branch
          %194 = sbr.rel (%p192) target = $region24
        $region23: #{tpu_custom_call.1} parent=11 // pred_region
          _
        $region24: #{tpu_custom_call.1} parent=11 // pred_fallthru
          _
        // Predicated region
        $region25: #{tpu_custom_call.1} parent=11 // pred_check
          %p195 = pneg %p143
        $region26: #{tpu_custom_call.1} parent=11 // pred_check_branch
          %197 = sbr.rel (%p195) target = $region28
        $region27: #{tpu_custom_call.1} parent=11 // pred_region
          _
        $region28: #{tpu_custom_call.1} parent=11 // pred_fallthru
          _
      $region12: #{tpu_custom_call.1} parent=5 // pred_fallthru
        _
      %p198 = scmp.lt.s32.totalorder %s19, 2
      // Predicated region
      $region29: #{tpu_custom_call.1} parent=5 // pred_check
        %p199 = pneg %p198
      $region30: #{tpu_custom_call.1} parent=5 // pred_check_branch
        %201 = sbr.rel (%p199) target = $region32
      $region31: #{tpu_custom_call.1} parent=5 // pred_region
        // Predicated region
        $region33: #{tpu_custom_call.1} parent=31 // pred_check
          %p202 = pneg %p53
        $region34: #{tpu_custom_call.1} parent=31 // pred_check_branch
          %204 = sbr.rel (%p202) target = $region36
        $region35: #{tpu_custom_call.1} parent=31 // pred_region
          %s205 = sand.u32 %s43, 1
          %s206 = scalar_lea.sflag [#allocation4], %s205
          %s207 = sand.u32 %s43, 1
          %s208 = smul.addr %s207, 16
          %s209 = scalar_lea.vmem [#allocation3], %s208
          %s210 = smul.u32 2, %s27
          %s212 = ssub.s32 256, 256
          %213 = vsyncadd %s206, %s212
          %s214 = smul.addr %s26, 2
          %s215 = sadd.s32 %s210, %s214
          %s216 = smul.addr %s215, 128
          %s217 = scalar_lea.hbm %s0, %s216
          %s219 = sshll.u32 %s209, 4
          %s220 = int_to_ptr.vmem [resolvable:$true] %s219
          %222 = dma.hbm_to_vmem [thread:$0]  %s217, 256, %s220, %s206
        $region36: #{tpu_custom_call.1} parent=31 // pred_fallthru
          _
      $region32: #{tpu_custom_call.1} parent=5 // pred_fallthru
        _
      %p223 = scmp.le.s32.totalorder 1, %s19
      %p224 = scmp.lt.s32.totalorder %s19, 3
      %p225 = pnand %p223, %p224
      %p226 = pneg %p225
      // Predicated region
      $region37: #{tpu_custom_call.1} parent=5 // pred_check
        _
      $region38: #{tpu_custom_call.1} parent=5 // pred_check_branch
        %228 = sbr.rel (%p225) target = $region40
      $region39: #{tpu_custom_call.1} parent=5 // pred_region
        %s229 = ssub.s32 %s19, 1
        %s230 = sand.u32 %s46, 1
        %s231 = scalar_lea.sflag [#allocation4], %s230
        %s232 = sand.u32 %s46, 1
        %s233 = smul.addr %s232, 16
        %s234 = scalar_lea.vmem [#allocation3], %s233
        // Predicated region
        $region41: #{tpu_custom_call.1} parent=39 // pred_check
          %p235 = pneg %p59
        $region42: #{tpu_custom_call.1} parent=39 // pred_check_branch
          %237 = sbr.rel (%p235) target = $region44
        $region43: #{tpu_custom_call.1} parent=39 // pred_region
          %238 = dma.done %s231, 256
        $region44: #{tpu_custom_call.1} parent=39 // pred_fallthru
          _
        %s239 = sand.u32 %s46, 1
        %s240 = scalar_lea.sflag [#allocation4], %s239
        %s241 = sand.u32 %s46, 1
        %s242 = smul.addr %s241, 16
        %s243 = scalar_lea.vmem [#allocation3], %s242
        %p244 = pneg %p59
        %p245 = pneg %p56
        %p246 = pneg %p80
        %p247 = pneg %p77
        %p248 = pneg %p101
        %p249 = pneg %p98
        %p250 = pneg %p122
        %p251 = pneg %p119
        %p252 = pneg %p143
        %p253 = pneg %p140
        %p254 = pneg %p171
        %p255 = pneg %p168
        %s256 = sand.u32 %s158, 1
        %s257 = scalar_lea.sflag [#allocation5], %s256
        %s258 = sand.u32 %s158, 1
        %s259 = smul.addr %s258, 8
        %s260 = scalar_lea.vmem [#allocation6], %s259
        %s261 = smul.u32 2, %s29
        %s262 = smul.u32 2, %s29
        %v263 = vld [vmem:[%s234] sm:$0xff]
        %v264 = vld [vmem:[%s234 + $0x8] sm:$0xff]
        %v265 = vld [vmem:[%s1] sm:$0xff]
        %v266 = vld [vmem:[%s2] sm:$0xff]
        %268 = vset.pattern.permute.xlu0 0
        %269 = vperm.xlu0 %268, %v266
        %v270 = vpop.permute.xlu0 %269
        %vm272 = vcmask 64512
        %v274 = vsel %vm272, %v265, 0
        %276 = vmatprep.subr.mxu0 0.0
        %277 = vmatpush1.msra.mxu0 0.0
        %278 = vmatprep.subr.mxu0 0.0
        %279 = vmatpush1.msra.mxu0 0.0
        %280 = vmatprep.subr.mxu0 0.0
        %281 = vmatpush1.msra.mxu0 0.0
        %282 = vmatprep.subr.mxu0 0.0
        %283 = vmatpush1.msra.mxu0 0.0
        %284 = vmatprep.subr.mxu0 0.0
        %285 = vmatpush1.msra.mxu0 0.0
        %286 = vmatprep.subr.mxu0 0.0
        %287 = vmatpush1.msra.mxu0 0.0
        %288 = vmatprep.subr.mxu0 0.0
        %289 = vmatpush1.msra.mxu0 0.0
        %290 = vmatprep.subr.mxu0 0.0
        %291 = vmatpush1.msra.mxu0 0.0
        %292 = vmatprep.subr.mxu0 0.0
        %293 = vmatpush1.msra.mxu0 0.0
        %294 = vmatprep.subr.mxu0 0.0
        %295 = vmatpush1.msra.mxu0 0.0
        %296 = vmatprep.subr.mxu0 0.0
        %297 = vmatpush1.msra.mxu0 0.0
        %298 = vmatprep.subr.mxu0 0.0
        %299 = vmatpush1.msra.mxu0 0.0
        %300 = vmatprep.subr.mxu0 0.0
        %301 = vmatpush1.msra.mxu0 0.0
        %302 = vmatprep.subr.mxu0 0.0
        %303 = vmatpush1.msra.mxu0 0.0
        %304 = vmatprep.subr.mxu0 0.0
        %305 = vmatpush1.msra.mxu0 0.0
        %306 = vmatprep.subr.mxu0 %v264
        %307 = vmatpush1.msra.mxu0 %v263
        %308 = vmatprep.subr.mxu0 0.0
        %309 = vmatpush2.msra.mxu0 0.0
        %310 = vmatprep.subr.mxu0 0.0
        %311 = vmatpush2.msra.mxu0 0.0
        %312 = vmatprep.subr.mxu0 0.0
        %313 = vmatpush2.msra.mxu0 0.0
        %314 = vmatprep.subr.mxu0 0.0
        %315 = vmatpush2.msra.mxu0 0.0
        %316 = vmatprep.subr.mxu0 0.0
        %317 = vmatpush2.msra.mxu0 0.0
        %318 = vmatprep.subr.mxu0 0.0
        %319 = vmatpush2.msra.mxu0 0.0
        %320 = vmatprep.subr.mxu0 0.0
        %321 = vmatpush2.msra.mxu0 0.0
        %322 = vmatprep.subr.mxu0 0.0
        %323 = vmatpush2.msra.mxu0 0.0
        %324 = vmatprep.subr.mxu0 0.0
        %325 = vmatpush2.msra.mxu0 0.0
        %326 = vmatprep.subr.mxu0 0.0
        %327 = vmatpush2.msra.mxu0 0.0
        %328 = vmatprep.subr.mxu0 0.0
        %329 = vmatpush2.msra.mxu0 0.0
        %330 = vmatprep.subr.mxu0 0.0
        %331 = vmatpush2.msra.mxu0 0.0
        %332 = vmatprep.subr.mxu0 0.0
        %333 = vmatpush2.msra.mxu0 0.0
        %334 = vmatprep.subr.mxu0 0.0
        %335 = vmatpush2.msra.mxu0 0.0
        %336 = vmatprep.subr.mxu0 0.0
        %337 = vmatpush2.msra.mxu0 0.0
        %338 = vmatprep.subr.mxu0 0.0
        %339 = vmatpush2.msra.mxu0 0.0
        %340 = vmatprep.mubr.f32.mxu0 0.0
        %341 = vmatmul.mubr.f32.gmra.mxu0 %v274
        %v342 = vpop.f32.mrf.mxu0
        %v343 = vadd.f32 %v270, %v342
        %v344 = vpop.f32.mrf.mxu0
        %v345 = vadd.f32 %v270, %v344
        %346 = vdwg.mxu0
        %v347 = vmax.f32 %v343, 0.0
        %v348 = vmax.f32 %v345, 0.0
        %v349 = vld [vmem:[%s3] sm:$0xff]
        %351 = vset.pattern.permute.xlu0 0
        %352 = vperm.xlu0 %351, %v349
        %v353 = vpop.permute.xlu0 %352
        %v355 = vmul.f32 %v347, %v353
        %v356 = vmul.f32 %v348, %v353
        %v357 = vrot.slane %v355, 4
        %v358 = vadd.f32 %v355, %v357
        %v359 = vrot.slane %v358, 2
        %v360 = vadd.f32 %v358, %v359
        %v361 = vrot.slane %v360, 1
        %v362 = vadd.f32 %v360, %v361
        %v363 = vrot.slane %v356, 4
        %v364 = vadd.f32 %v356, %v363
        %v365 = vrot.slane %v364, 2
        %v366 = vadd.f32 %v364, %v365
        %v367 = vrot.slane %v366, 1
        %v368 = vadd.f32 %v366, %v367
        %v369 = vld [vmem:[#allocation2] sm:$0x1]
        %371 = vset.pattern.permute.xlu0 0
        %372 = vperm.xlu0 %371, %v369
        %v373 = vpop.permute.xlu0 %372
        %v375 = vlaneseq
        %v376 = vshrl.u32 %v375, 7
        %v377 = vsub.s32 0, %v376
        %v378 = vrot.slane %v373, %v377
        %v379 = vadd.f32 %v362, %v378
        %v380 = vadd.f32 %v368, %v378
        %v381 = vxor.u32 %v379, 2147483648
        %v382 = vxor.u32 %v380, 2147483648
        %v383 = vmul.f32 %v381, 1.442695
        %v384 = vpow.pop %v383
        %v385 = vmul.f32 %v382, 1.442695
        %v386 = vpow.pop %v385
        %v387 = vadd.f32 %v384, 1.0
        %v388 = vadd.f32 %v386, 1.0
        %v389 = vrcp.pop %v387
        %v390 = vmul.f32 1.0, %v389
        %v391 = vrcp.pop %v388
        %v392 = vmul.f32 1.0, %v391
        %v393 = vmul.f32 %v263, %v390
        %v394 = vmul.f32 %v264, %v392
        %v397 = vcombine.low %v393, %v394
        %399 = vst [vmem:[%s260] sm:$0xff] %v397
        %s400 = sand.u32 %s158, 1
        %s401 = scalar_lea.sflag [#allocation5], %s400
        %s402 = sand.u32 %s158, 1
        %s403 = smul.addr %s402, 8
        %s404 = scalar_lea.vmem [#allocation6], %s403
        // Predicated region
        $region45: #{tpu_custom_call.1} parent=39 // pred_check
          %p405 = pneg %p168
        $region46: #{tpu_custom_call.1} parent=39 // pred_check_branch
          %407 = sbr.rel (%p405) target = $region48
        $region47: #{tpu_custom_call.1} parent=39 // pred_region
          %s408 = smul.u32 2, %s29
          %s410 = ssub.s32 128, 128
          %411 = vsyncadd %s401, %s410
          %s412 = smul.addr %s28, 2
          %s413 = sadd.s32 %s408, %s412
          %s414 = smul.addr %s413, 64
          %s415 = scalar_lea.hbm %s5, %s414
          %s417 = sshll.u32 %s404, 4
          %s418 = int_to_ptr.vmem [resolvable:$true] %s417
          %420 = dma.vmem_to_hbm [thread:$0]  %s418, 128, %s415, %s401
        $region48: #{tpu_custom_call.1} parent=39 // pred_fallthru
          _
      $region40: #{tpu_custom_call.1} parent=5 // pred_fallthru
        _
      %p421 = scmp.le.s32.totalorder 2, %s19
      // Predicated region
      $region49: #{tpu_custom_call.1} parent=5 // pred_check
        %p422 = pneg %p421
      $region50: #{tpu_custom_call.1} parent=5 // pred_check_branch
        %424 = sbr.rel (%p422) target = $region52
      $region51: #{tpu_custom_call.1} parent=5 // pred_region
        %s425 = ssub.s32 %s19, 2
        // Predicated region
        $region53: #{tpu_custom_call.1} parent=51 // pred_check
          %p426 = pneg %p174
        $region54: #{tpu_custom_call.1} parent=51 // pred_check_branch
          %428 = sbr.rel (%p426) target = $region56
        $region55: #{tpu_custom_call.1} parent=51 // pred_region
          %s429 = sand.u32 %s159, 1
          %s430 = scalar_lea.sflag [#allocation5], %s429
          %s431 = sand.u32 %s159, 1
          %s432 = smul.addr %s431, 8
          %s433 = scalar_lea.vmem [#allocation6], %s432
          %434 = dma.done %s430, 128
        $region56: #{tpu_custom_call.1} parent=51 // pred_fallthru
          _
      $region52: #{tpu_custom_call.1} parent=5 // pred_fallthru
        _
    $region6: #{tpu_custom_call.1} parent=1 // loop_footer
      %s23 = sadd.s32 1, %s19
    $region7: #{tpu_custom_call.1} parent=1 // loop_footer_branch
      %18 = sbr.rel target = $region3
    $region8: #{tpu_custom_call.1} parent=1 // loop_exit
      _
    %435 = vsyncpa [#allocation4], 1
    %s436 = scalar_lea.sflag [#allocation4], 1
    %437 = vsyncpa %s436, 1
    %438 = vsyncpa [#allocation5], 1
    %s439 = scalar_lea.sflag [#allocation5], 1
    %440 = vsyncpa %s439, 1

</llo_original>
